<compile_context>
chip_gen: v6e
topology: v6e:2x2x1
jax: 0.10.0
libtpu: 0.0.40
codegen_flags: <defaults>
</compile_context>

<pallas_src>
import math
import functools

import jax
import jax.numpy as jnp
from jax.experimental import pallas as pl
from jax.experimental.pallas import tpu as pltpu


def _round_up(x, m):
    return ((x + m - 1) // m) * m


def _cdiv(a, b):
    return (a + b - 1) // b


def _gelu_approx(x):
    # tanh-approx GELU: 2 VALU ops + 1 EUP tanh per element (vs 15-25 VALU for erf).
    # Deviation from torch's exact-erf GELU is ~1e-3, below bf16 round-off.
    return jax.nn.gelu(x, approximate=True)


def _gelu_exact(x):
    # torch.nn.GELU() default (used only by the f32 sanity reference).
    return 0.5 * x * (1.0 + jax.lax.erf(x * (1.0 / math.sqrt(2.0))))


def _mlp_kernel(n_layers, compute_dtype, x_ref, *refs):
    """refs = (w0, b0, w1, b1, ..., w_{L-1}, b_{L-1}, out_ref).

    x arrives f32 and is cast to bf16 in-kernel (VPU, hidden under slack).
    Weights are bf16, biases f32, accumulation f32 on the MXU.
    The layer loop is a static Python unroll.
    """
    out_ref = refs[-1]
    param_refs = refs[:-1]
    h = x_ref[...].astype(compute_dtype)             # (tm, in_dim) f32 -> bf16
    for i in range(n_layers):
        w = param_refs[2 * i][...]                   # (in, out) bf16
        b = param_refs[2 * i + 1][...]               # (1, out)  f32
        acc = jnp.dot(h, w, preferred_element_type=jnp.float32) + b
        if i < n_layers - 1:
            h = _gelu_approx(acc).astype(compute_dtype)   # back to bf16 for next MXU op
        else:
            out_ref[...] = acc.astype(out_ref.dtype)      # lane-dense bf16 store


def preprocess_params(params, compute_dtype=jnp.bfloat16):
    """One-time parameter prep (off the inference hot path).

    Pads the final layer's output features to a multiple of 128 (lane-dense
    store), casts weights to the MXU compute dtype, keeps biases f32 as (1, N).
    Returns (flat_params, out_dim, padded_out).
    """
    n_layers = len(params)
    out_dim = params[-1][0].shape[1]
    padded_out = _round_up(out_dim, 128)
    flat = []
    for li, (w, b) in enumerate(params):
        w = jnp.asarray(w, jnp.float32)
        b = jnp.asarray(b, jnp.float32)
        if li == n_layers - 1 and padded_out != out_dim:
            w = jnp.pad(w, ((0, 0), (0, padded_out - out_dim)))
            b = jnp.pad(b, (0, padded_out - out_dim))
        flat.append(w.astype(compute_dtype))          # bf16 MXU operand
        flat.append(b.reshape(1, -1))                 # f32 bias, 2-D
    return tuple(flat), out_dim, padded_out


def _choose_batch_tile(batch, block_batch):
    """Pick (tm, steps).  tm is a multiple of 16 (bf16 sublane packing); when the
    batch is tiled, the step count is made even so the 'parallel' axis splits
    cleanly across v7x's 2 TensorCores."""
    padded16 = _round_up(max(batch, 16), 16)
    if padded16 <= block_batch:
        return padded16, 1
    steps = _cdiv(batch, block_batch)
    if steps % 2:                                     # even grid for v7x megacore
        steps += 1
    tm = _round_up(_cdiv(batch, steps), 16)
    return tm, steps


def force_inference_forward(x, flat_params, out_dim, padded_out, *,
                            block_batch=1024,
                            compute_dtype=jnp.bfloat16,
                            out_dtype=jnp.float32):
    """x: (batch, input_dim) float32.  flat_params from preprocess_params()."""
    batch, in_dim = x.shape
    n_layers = len(flat_params) // 2

    tm, steps = _choose_batch_tile(batch, block_batch)
    padded_batch = tm * steps
    if padded_batch != batch:
        x = jnp.pad(x, ((0, padded_batch - batch), (0, 0)))

    grid = (steps,)

    in_specs = [pl.BlockSpec((tm, in_dim), lambda i: (i, 0))]
    for arr in flat_params:
        # Constant block index -> weights/biases stay VMEM-resident across steps.
        in_specs.append(pl.BlockSpec(arr.shape, lambda i: (0, 0)))
    out_specs = pl.BlockSpec((tm, padded_out), lambda i: (i, 0))

    # VMEM budget: double-buffered f32 x tile + bf16 out tile + resident params.
    vmem_est = 2 * (tm * in_dim * 4 + tm * padded_out * 2)
    for arr in flat_params:
        vmem_est += 2 * arr.size * arr.dtype.itemsize
    cp_kwargs = dict(dimension_semantics=("parallel",))
    if vmem_est > (16 << 20):                         # only needed for very large tm
        cp_kwargs["vmem_limit_bytes"] = min(int(vmem_est * 1.5), 48 << 20)

    kernel = functools.partial(_mlp_kernel, n_layers, compute_dtype)
    out = pl.pallas_call(
        kernel,
        out_shape=jax.ShapeDtypeStruct((padded_batch, padded_out), jnp.bfloat16),
        grid=grid,
        in_specs=in_specs,
        out_specs=out_specs,
        compiler_params=pltpu.CompilerParams(**cp_kwargs),
    )(x, *flat_params)
    return out[:batch, :out_dim].astype(out_dtype)


def init_params(key, input_dim, output_dim, hidden_layers):
    """Deterministic init mimicking torch.nn.Linear (uniform +/- 1/sqrt(fan_in))."""
    dims = [input_dim] + list(hidden_layers) + [output_dim]
    params = []
    for i in range(len(dims) - 1):
        fan_in, fan_out = dims[i], dims[i + 1]
        key, kw, kb = jax.random.split(key, 3)
        bound = 1.0 / math.sqrt(fan_in)
        w = jax.random.uniform(kw, (fan_in, fan_out), jnp.float32, -bound, bound)
        b = jax.random.uniform(kb, (fan_out,), jnp.float32, -bound, bound)
        params.append((w, b))
    return params


def _reference_forward_f32(x, params):
    # Exact-erf, full-f32 reference (matches torch semantics bit-for-concept).
    h = x
    n = len(params)
    for i, (w, b) in enumerate(params):
        h = h @ w + b
        if i < n - 1:
            h = _gelu_exact(h)
    return h


def _reference_forward_bf16(x, params, compute_dtype=jnp.bfloat16):
    # Mirrors the kernel's numerics: bf16 matmul inputs, f32 accumulation + bias,
    # tanh-approx GELU, final result rounded to bf16.
    h = x.astype(compute_dtype)
    n = len(params)
    for i, (w, b) in enumerate(params):
        acc = jnp.dot(h, w.astype(compute_dtype),
                      preferred_element_type=jnp.float32) + b.astype(jnp.float32)
        if i < n - 1:
            h = _gelu_approx(acc).astype(compute_dtype)
        else:
            return acc.astype(compute_dtype).astype(jnp.float32)
    return h.astype(jnp.float32)


if __name__ == "__main__":
    # Small shapes consistent with the module: latent -> forces MLP.
    input_dim = 32          # latent vector size
    hidden_layers = [64, 64]
    output_dim = 16         # inferred force components

    key = jax.random.PRNGKey(0)
    key, kx_small, kx_big = jax.random.split(key, 3)
    params = init_params(key, input_dim, output_dim, hidden_layers)
    flat_params, out_dim, padded_out = preprocess_params(params)   # one-time prep

    # Small case (single grid step).
    x_small = jax.random.normal(kx_small, (8, input_dim), jnp.float32)
    out_small = jax.block_until_ready(
        force_inference_forward(x_small, flat_params, out_dim, padded_out))
    assert out_small.shape == (8, output_dim), out_small.shape
    ref_bf16 = _reference_forward_bf16(x_small, params)
    ref_f32 = _reference_forward_f32(x_small, params)
    assert jnp.allclose(out_small, ref_bf16, atol=1e-2, rtol=1e-2), "mismatch vs bf16 ref"
    assert jnp.allclose(out_small, ref_f32, atol=6e-2, rtol=6e-2), "mismatch vs f32 ref"

    # Larger batch with a small block_batch to exercise the tiled, even-step
    # 'parallel' batch grid (4 steps here).
    x_big = jax.random.normal(kx_big, (200, input_dim), jnp.float32)
    out_big = jax.block_until_ready(
        force_inference_forward(x_big, flat_params, out_dim, padded_out,
                                block_batch=64))
    assert out_big.shape == (200, output_dim), out_big.shape
    ref_bf16_big = _reference_forward_bf16(x_big, params)
    assert jnp.allclose(out_big, ref_bf16_big, atol=1e-2, rtol=1e-2), \
        "mismatch vs bf16 ref (big)"

    print("KERNEL_OK")
</pallas_src>

<mosaic_0001>
module attributes {stable_mosaic.version = 11 : i64} {
  func.func @_mlp_kernel(%arg0: i32, %arg1: memref<16x32xf32, #tpu.memory_space<vmem>>, %arg2: memref<32x64xbf16, #tpu.memory_space<vmem>>, %arg3: memref<1x64xf32, #tpu.memory_space<vmem>>, %arg4: memref<64x64xbf16, #tpu.memory_space<vmem>>, %arg5: memref<1x64xf32, #tpu.memory_space<vmem>>, %arg6: memref<64x128xbf16, #tpu.memory_space<vmem>>, %arg7: memref<1x128xf32, #tpu.memory_space<vmem>>, %arg8: memref<16x128xbf16, #tpu.memory_space<vmem>>) attributes {dimension_semantics = [#tpu.dimension_semantics<parallel>], iteration_bounds = array<i64: 1>, scalar_prefetch = 0 : i64, scratch_operands = 0 : i64, tpu.core_type = #tpu.core_type<tc>, window_params = [{transform_indices = @transform_0, window_bounds = array<i64: 16, 32>}, {pipeline_mode = #tpu.pipeline_mode<synchronous>, transform_indices = @transform_1, window_bounds = array<i64: 32, 64>}, {pipeline_mode = #tpu.pipeline_mode<synchronous>, transform_indices = @transform_2, window_bounds = array<i64: 1, 64>}, {pipeline_mode = #tpu.pipeline_mode<synchronous>, transform_indices = @transform_3, window_bounds = array<i64: 64, 64>}, {pipeline_mode = #tpu.pipeline_mode<synchronous>, transform_indices = @transform_4, window_bounds = array<i64: 1, 64>}, {pipeline_mode = #tpu.pipeline_mode<synchronous>, transform_indices = @transform_5, window_bounds = array<i64: 64, 128>}, {pipeline_mode = #tpu.pipeline_mode<synchronous>, transform_indices = @transform_6, window_bounds = array<i64: 1, 128>}, {transform_indices = @transform_7, window_bounds = array<i64: 16, 128>}]} {
    %c0 = arith.constant 0 : index
    %c0_0 = arith.constant 0 : index
    %0 = vector.load %arg1[%c0, %c0_0] : memref<16x32xf32, #tpu.memory_space<vmem>>, vector<16x32xf32>
    %1 = arith.truncf %0 : vector<16x32xf32> to vector<16x32xbf16>
    %c0_1 = arith.constant 0 : index
    %c0_2 = arith.constant 0 : index
    %2 = vector.load %arg2[%c0_1, %c0_2] : memref<32x64xbf16, #tpu.memory_space<vmem>>, vector<32x64xbf16>
    %c0_3 = arith.constant 0 : index
    %c0_4 = arith.constant 0 : index
    %3 = vector.load %arg3[%c0_3, %c0_4] : memref<1x64xf32, #tpu.memory_space<vmem>>, vector<1x64xf32>
    %cst = arith.constant dense<0.000000e+00> : vector<16x64xf32>
    %4 = tpu.matmul %1, %2, %cst {dimension_numbers = #tpu.dot_dimension_numbers<[1], [0], [0], [1], [0, 0, 1, 1], [], []>} : vector<16x32xbf16>, vector<32x64xbf16>, vector<16x64xf32> -> vector<16x64xf32>
    %5 = vector.broadcast %3 : vector<1x64xf32> to vector<16x64xf32>
    %6 = arith.addf %4, %5 : vector<16x64xf32>
    %7 = arith.mulf %6, %6 : vector<16x64xf32>
    %8 = arith.mulf %6, %7 : vector<16x64xf32>
    %cst_5 = arith.constant 4.471500e-02 : f32
    %9 = vector.broadcast %cst_5 : f32 to vector<16x64xf32>
    %10 = arith.mulf %9, %8 : vector<16x64xf32>
    %11 = arith.addf %6, %10 : vector<16x64xf32>
    %cst_6 = arith.constant 0.797884583 : f32
    %12 = vector.broadcast %cst_6 : f32 to vector<16x64xf32>
    %13 = arith.mulf %12, %11 : vector<16x64xf32>
    %14 = math.tanh %13 : vector<16x64xf32>
    %cst_7 = arith.constant 1.000000e+00 : f32
    %15 = vector.broadcast %cst_7 : f32 to vector<16x64xf32>
    %16 = arith.addf %15, %14 : vector<16x64xf32>
    %cst_8 = arith.constant 5.000000e-01 : f32
    %17 = vector.broadcast %cst_8 : f32 to vector<16x64xf32>
    %18 = arith.mulf %17, %16 : vector<16x64xf32>
    %19 = arith.mulf %6, %18 : vector<16x64xf32>
    %20 = arith.truncf %19 : vector<16x64xf32> to vector<16x64xbf16>
    %c0_9 = arith.constant 0 : index
    %c0_10 = arith.constant 0 : index
    %21 = vector.load %arg4[%c0_9, %c0_10] : memref<64x64xbf16, #tpu.memory_space<vmem>>, vector<64x64xbf16>
    %c0_11 = arith.constant 0 : index
    %c0_12 = arith.constant 0 : index
    %22 = vector.load %arg5[%c0_11, %c0_12] : memref<1x64xf32, #tpu.memory_space<vmem>>, vector<1x64xf32>
    %cst_13 = arith.constant dense<0.000000e+00> : vector<16x64xf32>
    %23 = tpu.matmul %20, %21, %cst_13 {dimension_numbers = #tpu.dot_dimension_numbers<[1], [0], [0], [1], [0, 0, 1, 1], [], []>} : vector<16x64xbf16>, vector<64x64xbf16>, vector<16x64xf32> -> vector<16x64xf32>
    %24 = vector.broadcast %22 : vector<1x64xf32> to vector<16x64xf32>
    %25 = arith.addf %23, %24 : vector<16x64xf32>
    %26 = arith.mulf %25, %25 : vector<16x64xf32>
    %27 = arith.mulf %25, %26 : vector<16x64xf32>
    %cst_14 = arith.constant 4.471500e-02 : f32
    %28 = vector.broadcast %cst_14 : f32 to vector<16x64xf32>
    %29 = arith.mulf %28, %27 : vector<16x64xf32>
    %30 = arith.addf %25, %29 : vector<16x64xf32>
    %cst_15 = arith.constant 0.797884583 : f32
    %31 = vector.broadcast %cst_15 : f32 to vector<16x64xf32>
    %32 = arith.mulf %31, %30 : vector<16x64xf32>
    %33 = math.tanh %32 : vector<16x64xf32>
    %cst_16 = arith.constant 1.000000e+00 : f32
    %34 = vector.broadcast %cst_16 : f32 to vector<16x64xf32>
    %35 = arith.addf %34, %33 : vector<16x64xf32>
    %cst_17 = arith.constant 5.000000e-01 : f32
    %36 = vector.broadcast %cst_17 : f32 to vector<16x64xf32>
    %37 = arith.mulf %36, %35 : vector<16x64xf32>
    %38 = arith.mulf %25, %37 : vector<16x64xf32>
    %39 = arith.truncf %38 : vector<16x64xf32> to vector<16x64xbf16>
    %c0_18 = arith.constant 0 : index
    %c0_19 = arith.constant 0 : index
    %40 = vector.load %arg6[%c0_18, %c0_19] : memref<64x128xbf16, #tpu.memory_space<vmem>>, vector<64x128xbf16>
    %c0_20 = arith.constant 0 : index
    %c0_21 = arith.constant 0 : index
    %41 = vector.load %arg7[%c0_20, %c0_21] : memref<1x128xf32, #tpu.memory_space<vmem>>, vector<1x128xf32>
    %cst_22 = arith.constant dense<0.000000e+00> : vector<16x128xf32>
    %42 = tpu.matmul %39, %40, %cst_22 {dimension_numbers = #tpu.dot_dimension_numbers<[1], [0], [0], [1], [0, 0, 1, 1], [], []>} : vector<16x64xbf16>, vector<64x128xbf16>, vector<16x128xf32> -> vector<16x128xf32>
    %43 = vector.broadcast %41 : vector<1x128xf32> to vector<16x128xf32>
    %44 = arith.addf %42, %43 : vector<16x128xf32>
    %45 = arith.truncf %44 : vector<16x128xf32> to vector<16x128xbf16>
    %c0_23 = arith.constant 0 : index
    %c0_24 = arith.constant 0 : index
    %46 = vector.load %arg8[%c0_23, %c0_24] : memref<16x128xbf16, #tpu.memory_space<vmem>>, vector<16x128xbf16>
    tpu.vector_store %arg8[%c0_23, %c0_24], %45 {strides = array<i32>} : memref<16x128xbf16, #tpu.memory_space<vmem>>, vector<16x128xbf16>,
    return
  }
  func.func @transform_0(%arg0: i32) -> (i32, i32) {
    %c0_i32 = arith.constant 0 : i32
    %c0_i32_0 = arith.constant 0 : i32
    return %arg0, %c0_i32 : i32, i32
  }
  func.func @transform_1(%arg0: i32) -> (i32, i32) {
    %c0_i32 = arith.constant 0 : i32
    %c0_i32_0 = arith.constant 0 : i32
    %c0_i32_1 = arith.constant 0 : i32
    return %c0_i32, %c0_i32_0 : i32, i32
  }
  func.func @transform_2(%arg0: i32) -> (i32, i32) {
    %c0_i32 = arith.constant 0 : i32
    %c0_i32_0 = arith.constant 0 : i32
    %c0_i32_1 = arith.constant 0 : i32
    return %c0_i32, %c0_i32_0 : i32, i32
  }
  func.func @transform_3(%arg0: i32) -> (i32, i32) {
    %c0_i32 = arith.constant 0 : i32
    %c0_i32_0 = arith.constant 0 : i32
    %c0_i32_1 = arith.constant 0 : i32
    return %c0_i32, %c0_i32_0 : i32, i32
  }
  func.func @transform_4(%arg0: i32) -> (i32, i32) {
    %c0_i32 = arith.constant 0 : i32
    %c0_i32_0 = arith.constant 0 : i32
    %c0_i32_1 = arith.constant 0 : i32
    return %c0_i32, %c0_i32_0 : i32, i32
  }
  func.func @transform_5(%arg0: i32) -> (i32, i32) {
    %c0_i32 = arith.constant 0 : i32
    %c0_i32_0 = arith.constant 0 : i32
    %c0_i32_1 = arith.constant 0 : i32
    return %c0_i32, %c0_i32_0 : i32, i32
  }
  func.func @transform_6(%arg0: i32) -> (i32, i32) {
    %c0_i32 = arith.constant 0 : i32
    %c0_i32_0 = arith.constant 0 : i32
    %c0_i32_1 = arith.constant 0 : i32
    return %c0_i32, %c0_i32_0 : i32, i32
  }
  func.func @transform_7(%arg0: i32) -> (i32, i32) {
    %c0_i32 = arith.constant 0 : i32
    %c0_i32_0 = arith.constant 0 : i32
    return %arg0, %c0_i32 : i32, i32
  }
}

</mosaic_0001>

<llo_original>
// kernel: tpu_custom_call.1
$region0: #{tpu_custom_call.1}
  #allocation0 [shape = 'u32[]', space=smem, size = 0x4, offset = 0x4, fixed_abs, tag = 'smem constant byte address 0x4 - core index']
  #allocation1 [shape = 'u32[144,128]{1,0:T(1,128)}', space=vmem, size = 0x12000, scoped, tag = 'internal scratch']
  %s0 = inlined_call_operand.hbm [shape: f32[16,32], index: 0, kind: input, shape index: {}]
  %s1 = inlined_call_operand.hbm [shape: bf16[32,64], index: 1, kind: input, shape index: {}]
  %s2 = inlined_call_operand.vmem [shape: f32[1,64], index: 2, kind: input, shape index: {}]
  %s3 = inlined_call_operand.hbm [shape: bf16[64,64], index: 3, kind: input, shape index: {}]
  %s4 = inlined_call_operand.vmem [shape: f32[1,64], index: 4, kind: input, shape index: {}]
  %s5 = inlined_call_operand.hbm [shape: bf16[64,128], index: 5, kind: input, shape index: {}]
  %s6 = inlined_call_operand.vmem [shape: f32[1,128], index: 6, kind: input, shape index: {}]
  %s7 = inlined_call_operand.hbm [shape: bf16[16,128], index: 7, kind: output, shape index: {}]
  %s8 = sld [smem:[#allocation0]]
  $region54: #{tpu_custom_call.1} parent=0
    _
  %s10 = ssub.s32 1, %s8
  %s11 = scalar_select 0, %s10, %s8
  $region1: #{tpu_custom_call.1} parent=0
    #allocation2 [shape = 'u8[8192]{0}', space=vmem, size = 0x2000, scoped, tag = 'input window, operand 0, single buffered']
    #allocation3 [shape = 's32[1]{0}', space=sflag, size = 0x4, scoped, tag = 'scoped memory for tpu_custom_call.1']
    #allocation4 [shape = 's32[1]{0}', space=sflag, size = 0x4, scoped, tag = 'scoped memory for tpu_custom_call.1']
    #allocation5 [shape = 'u8[8192]{0}', space=vmem, size = 0x2000, scoped, tag = 'input window, operand 1, single buffered']
    #allocation6 [shape = 's32[1]{0}', space=sflag, size = 0x4, scoped, tag = 'scoped memory for tpu_custom_call.1']
    #allocation7 [shape = 'u8[16384]{0}', space=vmem, size = 0x4000, scoped, tag = 'input window, operand 3, single buffered']
    #allocation8 [shape = 'u8[16384]{0}', space=vmem, size = 0x4000, scoped, tag = 'input window, operand 5, single buffered']
    #allocation9 [shape = 's32[1]{0}', space=sflag, size = 0x4, scoped, tag = 'scoped memory for tpu_custom_call.1']
    #allocation10 [shape = 'u8[4096]{0}', space=vmem, size = 0x1000, scoped, tag = 'output window, operand 0, single buffered']
    %12 = vsyncpa [#allocation3], 0
    %13 = vsyncpa [#allocation6], 0
    %14 = vsyncpa [#allocation9], 0
    %15 = vsyncpa [#allocation4], 0
    // Predicated region
    $region2: #{tpu_custom_call.1} parent=1 // pred_check
      _
    $region3: #{tpu_custom_call.1} parent=1 // pred_check_branch
      %17 = sbr.rel (0) target = $region5
    $region4: #{tpu_custom_call.1} parent=1 // pred_region
      %s19 = ssub.s32 256, 256
      %20 = vsyncadd [#allocation3], %s19
      %s21 = sshll.u32 [#allocation2], 4
      %s22 = int_to_ptr.vmem [resolvable:$true] %s21
      %27 = dma.hbm_to_vmem [thread:$0]  %s0, 256, %s22, [#allocation3], 128, 128, 8
    $region5: #{tpu_custom_call.1} parent=1 // pred_fallthru
      _
    // Predicated region
    $region6: #{tpu_custom_call.1} parent=1 // pred_check
      _
    $region7: #{tpu_custom_call.1} parent=1 // pred_check_branch
      %29 = sbr.rel (0) target = $region9
    $region8: #{tpu_custom_call.1} parent=1 // pred_region
      %s31 = ssub.s32 256, 256
      %32 = vsyncadd [#allocation6], %s31
      %s33 = sshll.u32 [#allocation5], 4
      %s34 = int_to_ptr.vmem [resolvable:$true] %s33
      %39 = dma.hbm_to_vmem [thread:$0]  %s1, 256, %s34, [#allocation6], 64, 64, 4
    $region9: #{tpu_custom_call.1} parent=1 // pred_fallthru
      _
    // Predicated region
    $region10: #{tpu_custom_call.1} parent=1 // pred_check
      _
    $region11: #{tpu_custom_call.1} parent=1 // pred_check_branch
      %41 = sbr.rel (0) target = $region13
    $region12: #{tpu_custom_call.1} parent=1 // pred_region
      _
    $region13: #{tpu_custom_call.1} parent=1 // pred_fallthru
      _
    // Predicated region
    $region14: #{tpu_custom_call.1} parent=1 // pred_check
      _
    $region15: #{tpu_custom_call.1} parent=1 // pred_check_branch
      %43 = sbr.rel (0) target = $region17
    $region16: #{tpu_custom_call.1} parent=1 // pred_region
      %s45 = ssub.s32 512, 512
      %46 = vsyncadd [#allocation6], %s45
      %s47 = sshll.u32 [#allocation7], 4
      %s48 = int_to_ptr.vmem [resolvable:$true] %s47
      %53 = dma.hbm_to_vmem [thread:$0]  %s3, 512, %s48, [#allocation6], 64, 64, 4
    $region17: #{tpu_custom_call.1} parent=1 // pred_fallthru
      _
    // Predicated region
    $region18: #{tpu_custom_call.1} parent=1 // pred_check
      _
    $region19: #{tpu_custom_call.1} parent=1 // pred_check_branch
      %55 = sbr.rel (0) target = $region21
    $region20: #{tpu_custom_call.1} parent=1 // pred_region
      _
    $region21: #{tpu_custom_call.1} parent=1 // pred_fallthru
      _
    // Predicated region
    $region22: #{tpu_custom_call.1} parent=1 // pred_check
      _
    $region23: #{tpu_custom_call.1} parent=1 // pred_check_branch
      %57 = sbr.rel (0) target = $region25
    $region24: #{tpu_custom_call.1} parent=1 // pred_region
      %s59 = ssub.s32 512, 512
      %60 = vsyncadd [#allocation9], %s59
      %s61 = sshll.u32 [#allocation8], 4
      %s62 = int_to_ptr.vmem [resolvable:$true] %s61
      %67 = dma.hbm_to_vmem [thread:$0]  %s5, 512, %s62, [#allocation9], 64, 64, 4
    $region25: #{tpu_custom_call.1} parent=1 // pred_fallthru
      _
    // Predicated region
    $region26: #{tpu_custom_call.1} parent=1 // pred_check
      _
    $region27: #{tpu_custom_call.1} parent=1 // pred_check_branch
      %69 = sbr.rel (0) target = $region29
    $region28: #{tpu_custom_call.1} parent=1 // pred_region
      _
    $region29: #{tpu_custom_call.1} parent=1 // pred_fallthru
      _
    // Predicated region
    $region30: #{tpu_custom_call.1} parent=1 // pred_check
      _
    $region31: #{tpu_custom_call.1} parent=1 // pred_check_branch
      %71 = sbr.rel (0) target = $region33
    $region32: #{tpu_custom_call.1} parent=1 // pred_region
      %72 = dma.done [#allocation3], 256
    $region33: #{tpu_custom_call.1} parent=1 // pred_fallthru
      _
    // Predicated region
    $region34: #{tpu_custom_call.1} parent=1 // pred_check
      _
    $region35: #{tpu_custom_call.1} parent=1 // pred_check_branch
      %74 = sbr.rel (0) target = $region37
    $region36: #{tpu_custom_call.1} parent=1 // pred_region
      %75 = dma.done [#allocation6], 256
    $region37: #{tpu_custom_call.1} parent=1 // pred_fallthru
      _
    // Predicated region
    $region38: #{tpu_custom_call.1} parent=1 // pred_check
      _
    $region39: #{tpu_custom_call.1} parent=1 // pred_check_branch
      %77 = sbr.rel (0) target = $region41
    $region40: #{tpu_custom_call.1} parent=1 // pred_region
      %78 = dma.done [#allocation6], 512
    $region41: #{tpu_custom_call.1} parent=1 // pred_fallthru
      _
    // Predicated region
    $region42: #{tpu_custom_call.1} parent=1 // pred_check
      _
    $region43: #{tpu_custom_call.1} parent=1 // pred_check_branch
      %80 = sbr.rel (0) target = $region45
    $region44: #{tpu_custom_call.1} parent=1 // pred_region
      %81 = dma.done [#allocation9], 512
    $region45: #{tpu_custom_call.1} parent=1 // pred_fallthru
      _
    %v83 = vld [vmem:[#allocation2] sm:$0xff]
    %v84 = vld [vmem:[#allocation2 + $0x8] sm:$0xff]
    %v85 = vpack.c.bf16 %v84, %v83
    %v86 = vld [vmem:[#allocation5] sm:$0xf]
    %v87 = vld [vmem:[#allocation5 + $0x4] sm:$0xf]
    %v88 = vld [vmem:[#allocation5 + $0x8] sm:$0xf]
    %v89 = vld [vmem:[#allocation5 + $0xc] sm:$0xf]
    %v90 = vld [vmem:[%s2] sm:$0x1]
    %v92 = vlaneseq
    %v93 = vshrl.u32 %v92, 7
    %v94 = vsub.s32 0, %v93
    %v95 = vrot.slane %v90, %v94
    %v101 = vunpack.c.l.b16 %v86
    %v102 = vunpack.c.l.b16 %v87
    %v103 = vunpack.c.l.b16 %v88
    %v104 = vunpack.c.l.b16 %v89
    %v105 = vpack.c.b16 %v102, %v101
    %v106 = vpack.c.b16 %v104, %v103
    %vm109 = vcmask 261120
    %v111 = vsel %vm109, %v85, 0
    %113 = vmatprep.subr.bf16.mxu0 0
    %114 = vmatpush1.bf16.msra.mxu0 0
    %115 = vmatprep.subr.bf16.mxu0 0
    %116 = vmatpush1.bf16.msra.mxu0 0
    %117 = vmatprep.subr.bf16.mxu0 0
    %118 = vmatpush1.bf16.msra.mxu0 0
    %119 = vmatprep.subr.bf16.mxu0 0
    %120 = vmatpush1.bf16.msra.mxu0 0
    %121 = vmatprep.subr.bf16.mxu0 0
    %122 = vmatpush1.bf16.msra.mxu0 0
    %123 = vmatprep.subr.bf16.mxu0 0
    %124 = vmatpush1.bf16.msra.mxu0 0
    %125 = vmatprep.subr.bf16.mxu0 0
    %126 = vmatpush1.bf16.msra.mxu0 %v106
    %127 = vmatprep.subr.bf16.mxu0 0
    %128 = vmatpush1.bf16.msra.mxu0 %v105
    %129 = vmatprep.subr.bf16.mxu0 0
    %130 = vmatpush2.bf16.msra.mxu0 0
    %131 = vmatprep.subr.bf16.mxu0 0
    %132 = vmatpush2.bf16.msra.mxu0 0
    %133 = vmatprep.subr.bf16.mxu0 0
    %134 = vmatpush2.bf16.msra.mxu0 0
    %135 = vmatprep.subr.bf16.mxu0 0
    %136 = vmatpush2.bf16.msra.mxu0 0
    %137 = vmatprep.subr.bf16.mxu0 0
    %138 = vmatpush2.bf16.msra.mxu0 0
    %139 = vmatprep.subr.bf16.mxu0 0
    %140 = vmatpush2.bf16.msra.mxu0 0
    %141 = vmatprep.subr.bf16.mxu0 0
    %142 = vmatpush2.bf16.msra.mxu0 0
    %143 = vmatprep.subr.bf16.mxu0 0
    %144 = vmatpush2.bf16.msra.mxu0 0
    %145 = vmatprep.mubr.bf16.mxu0 0
    %146 = vmatmul.mubr.bf16.gmra.mxu0 %v111
    %v147 = vpop.f32.mrf.mxu0
    %v148 = vadd.f32 %v95, %v147
    %v149 = vpop.f32.mrf.mxu0
    %v150 = vpop.f32.mrf.mxu0
    %v151 = vadd.f32 %v95, %v150
    %v152 = vpop.f32.mrf.mxu0
    %153 = vdwg.mxu0
    %v154 = vmul.f32 %v148, %v148
    %v155 = vmul.f32 %v151, %v151
    %v156 = vmul.f32 %v148, %v154
    %v157 = vmul.f32 %v151, %v155
    %v158 = vmul.f32 %v156, 0.044715
    %v159 = vmul.f32 %v157, 0.044715
    %v160 = vadd.f32 %v148, %v158
    %v161 = vadd.f32 %v151, %v159
    %v162 = vmul.f32 %v160, 0.7978846
    %v163 = vmul.f32 %v161, 0.7978846
    %v164 = vtanh.pop %v162
    %v165 = vtanh.pop %v163
    %v166 = vadd.f32 %v164, 1.0
    %v167 = vadd.f32 %v165, 1.0
    %v168 = vmul.f32 %v166, 0.5
    %v169 = vmul.f32 %v167, 0.5
    %v170 = vmul.f32 %v148, %v168
    %v171 = vmul.f32 %v151, %v169
    %v172 = vpack.c.bf16 %v171, %v170
    %v173 = vld [vmem:[#allocation7] sm:$0xf]
    %v174 = vld [vmem:[#allocation7 + $0x4] sm:$0xf]
    %v175 = vld [vmem:[#allocation7 + $0x8] sm:$0xf]
    %v176 = vld [vmem:[#allocation7 + $0xc] sm:$0xf]
    %v177 = vld [vmem:[#allocation7 + $0x10] sm:$0xf]
    %v178 = vld [vmem:[#allocation7 + $0x14] sm:$0xf]
    %v179 = vld [vmem:[#allocation7 + $0x18] sm:$0xf]
    %v180 = vld [vmem:[#allocation7 + $0x1c] sm:$0xf]
    %v181 = vld [vmem:[%s4] sm:$0x1]
    %v183 = vlaneseq
    %v184 = vshrl.u32 %v183, 7
    %v185 = vsub.s32 0, %v184
    %v186 = vrot.slane %v181, %v185
    %v196 = vunpack.c.l.b16 %v173
    %v197 = vunpack.c.l.b16 %v174
    %v198 = vunpack.c.l.b16 %v175
    %v199 = vunpack.c.l.b16 %v176
    %v200 = vunpack.c.l.b16 %v177
    %v201 = vunpack.c.l.b16 %v178
    %v202 = vunpack.c.l.b16 %v179
    %v203 = vunpack.c.l.b16 %v180
    %v204 = vpack.c.b16 %v197, %v196
    %v205 = vpack.c.b16 %v199, %v198
    %v206 = vpack.c.b16 %v201, %v200
    %v207 = vpack.c.b16 %v203, %v202
    %vm212 = vcmask 523264
    %v214 = vsel %vm212, %v172, 0
    %216 = vmatprep.subr.bf16.mxu0 0
    %217 = vmatpush1.bf16.msra.mxu0 0
    %218 = vmatprep.subr.bf16.mxu0 0
    %219 = vmatpush1.bf16.msra.mxu0 0
    %220 = vmatprep.subr.bf16.mxu0 0
    %221 = vmatpush1.bf16.msra.mxu0 0
    %222 = vmatprep.subr.bf16.mxu0 0
    %223 = vmatpush1.bf16.msra.mxu0 0
    %224 = vmatprep.subr.bf16.mxu0 0
    %225 = vmatpush1.bf16.msra.mxu0 %v207
    %226 = vmatprep.subr.bf16.mxu0 0
    %227 = vmatpush1.bf16.msra.mxu0 %v206
    %228 = vmatprep.subr.bf16.mxu0 0
    %229 = vmatpush1.bf16.msra.mxu0 %v205
    %230 = vmatprep.subr.bf16.mxu0 0
    %231 = vmatpush1.bf16.msra.mxu0 %v204
    %232 = vmatprep.subr.bf16.mxu0 0
    %233 = vmatpush2.bf16.msra.mxu0 0
    %234 = vmatprep.subr.bf16.mxu0 0
    %235 = vmatpush2.bf16.msra.mxu0 0
    %236 = vmatprep.subr.bf16.mxu0 0
    %237 = vmatpush2.bf16.msra.mxu0 0
    %238 = vmatprep.subr.bf16.mxu0 0
    %239 = vmatpush2.bf16.msra.mxu0 0
    %240 = vmatprep.subr.bf16.mxu0 0
    %241 = vmatpush2.bf16.msra.mxu0 0
    %242 = vmatprep.subr.bf16.mxu0 0
    %243 = vmatpush2.bf16.msra.mxu0 0
    %244 = vmatprep.subr.bf16.mxu0 0
    %245 = vmatpush2.bf16.msra.mxu0 0
    %246 = vmatprep.subr.bf16.mxu0 0
    %247 = vmatpush2.bf16.msra.mxu0 0
    %248 = vmatprep.mubr.bf16.mxu0 0
    %249 = vmatmul.mubr.bf16.gmra.mxu0 %v214
    %v250 = vpop.f32.mrf.mxu0
    %v251 = vadd.f32 %v186, %v250
    %v252 = vpop.f32.mrf.mxu0
    %v253 = vpop.f32.mrf.mxu0
    %v254 = vadd.f32 %v186, %v253
    %v255 = vpop.f32.mrf.mxu0
    %256 = vdwg.mxu0
    %v257 = vmul.f32 %v251, %v251
    %v258 = vmul.f32 %v254, %v254
    %v259 = vmul.f32 %v251, %v257
    %v260 = vmul.f32 %v254, %v258
    %v261 = vmul.f32 %v259, 0.044715
    %v262 = vmul.f32 %v260, 0.044715
    %v263 = vadd.f32 %v251, %v261
    %v264 = vadd.f32 %v254, %v262
    %v265 = vmul.f32 %v263, 0.7978846
    %v266 = vmul.f32 %v264, 0.7978846
    %v267 = vtanh.pop %v265
    %v268 = vtanh.pop %v266
    %v269 = vadd.f32 %v267, 1.0
    %v270 = vadd.f32 %v268, 1.0
    %v271 = vmul.f32 %v269, 0.5
    %v272 = vmul.f32 %v270, 0.5
    %v273 = vmul.f32 %v251, %v271
    %v274 = vmul.f32 %v254, %v272
    %v275 = vpack.c.bf16 %v274, %v273
    %v276 = vld [vmem:[#allocation8] sm:$0xf]
    %v277 = vld [vmem:[#allocation8 + $0x4] sm:$0xf]
    %v278 = vld [vmem:[#allocation8 + $0x8] sm:$0xf]
    %v279 = vld [vmem:[#allocation8 + $0xc] sm:$0xf]
    %v280 = vld [vmem:[#allocation8 + $0x10] sm:$0xf]
    %v281 = vld [vmem:[#allocation8 + $0x14] sm:$0xf]
    %v282 = vld [vmem:[#allocation8 + $0x18] sm:$0xf]
    %v283 = vld [vmem:[#allocation8 + $0x1c] sm:$0xf]
    %v284 = vld [vmem:[%s6] sm:$0x1]
    %v286 = vlaneseq
    %v287 = vshrl.u32 %v286, 7
    %v288 = vsub.s32 0, %v287
    %v289 = vrot.slane %v284, %v288
    %v299 = vunpack.c.l.b16 %v276
    %v300 = vunpack.c.l.b16 %v277
    %v301 = vunpack.c.l.b16 %v278
    %v302 = vunpack.c.l.b16 %v279
    %v303 = vunpack.c.l.b16 %v280
    %v304 = vunpack.c.l.b16 %v281
    %v305 = vunpack.c.l.b16 %v282
    %v306 = vunpack.c.l.b16 %v283
    %v307 = vpack.c.b16 %v300, %v299
    %v308 = vpack.c.b16 %v302, %v301
    %v309 = vpack.c.b16 %v304, %v303
    %v310 = vpack.c.b16 %v306, %v305
    %v316 = vsel %vm212, %v275, 0
    %318 = vmatprep.subr.bf16.mxu0 0
    %319 = vmatpush1.bf16.msra.mxu0 0
    %320 = vmatprep.subr.bf16.mxu0 0
    %321 = vmatpush1.bf16.msra.mxu0 0
    %322 = vmatprep.subr.bf16.mxu0 0
    %323 = vmatpush1.bf16.msra.mxu0 0
    %324 = vmatprep.subr.bf16.mxu0 0
    %325 = vmatpush1.bf16.msra.mxu0 0
    %326 = vmatprep.subr.bf16.mxu0 0
    %327 = vmatpush1.bf16.msra.mxu0 %v310
    %328 = vmatprep.subr.bf16.mxu0 0
    %329 = vmatpush1.bf16.msra.mxu0 %v309
    %330 = vmatprep.subr.bf16.mxu0 0
    %331 = vmatpush1.bf16.msra.mxu0 %v308
    %332 = vmatprep.subr.bf16.mxu0 0
    %333 = vmatpush1.bf16.msra.mxu0 %v307
    %334 = vmatprep.subr.bf16.mxu0 0
    %335 = vmatpush2.bf16.msra.mxu0 0
    %336 = vmatprep.subr.bf16.mxu0 0
    %337 = vmatpush2.bf16.msra.mxu0 0
    %338 = vmatprep.subr.bf16.mxu0 0
    %339 = vmatpush2.bf16.msra.mxu0 0
    %340 = vmatprep.subr.bf16.mxu0 0
    %341 = vmatpush2.bf16.msra.mxu0 0
    %342 = vmatprep.subr.bf16.mxu0 0
    %343 = vmatpush2.bf16.msra.mxu0 0
    %344 = vmatprep.subr.bf16.mxu0 0
    %345 = vmatpush2.bf16.msra.mxu0 0
    %346 = vmatprep.subr.bf16.mxu0 0
    %347 = vmatpush2.bf16.msra.mxu0 0
    %348 = vmatprep.subr.bf16.mxu0 0
    %349 = vmatpush2.bf16.msra.mxu0 0
    %350 = vmatprep.mubr.bf16.mxu0 0
    %351 = vmatmul.mubr.bf16.gmra.mxu0 %v316
    %v352 = vpop.f32.mrf.mxu0
    %v353 = vadd.f32 %v289, %v352
    %v354 = vpop.f32.mrf.mxu0
    %v355 = vpop.f32.mrf.mxu0
    %v356 = vadd.f32 %v289, %v355
    %v357 = vpop.f32.mrf.mxu0
    %358 = vdwg.mxu0
    %v359 = vpack.c.bf16 %v356, %v353
    %v361 = vunpack.c.l.b16 %v359
    %v362 = vunpack.c.h.b16 %v359
    %v363 = vpack.c.b16 %v361, %v361
    %v364 = vpack.c.b16 %v362, %v362
    %367 = vst [vmem:[#allocation10] sm:$0xf] %v363
    %368 = vst [vmem:[#allocation10 + $0x4] sm:$0xf] %v364
    // Predicated region
    $region46: #{tpu_custom_call.1} parent=1 // pred_check
      _
    $region47: #{tpu_custom_call.1} parent=1 // pred_check_branch
      %370 = sbr.rel (0) target = $region49
    $region48: #{tpu_custom_call.1} parent=1 // pred_region
      %s372 = ssub.s32 128, 128
      %373 = vsyncadd [#allocation4], %s372
      %s374 = sshll.u32 [#allocation10], 4
      %s375 = int_to_ptr.vmem [resolvable:$true] %s374
      %380 = dma.vmem_to_hbm [thread:$0]  %s375, 128, %s7, [#allocation4], 64, 64, 4
    $region49: #{tpu_custom_call.1} parent=1 // pred_fallthru
      _
    // Predicated region
    $region50: #{tpu_custom_call.1} parent=1 // pred_check
      _
    $region51: #{tpu_custom_call.1} parent=1 // pred_check_branch
      %382 = sbr.rel (0) target = $region53
    $region52: #{tpu_custom_call.1} parent=1 // pred_region
      %383 = dma.done [#allocation4], 128
    $region53: #{tpu_custom_call.1} parent=1 // pred_fallthru
      _
    %384 = vsyncpa [#allocation3], 1
    %385 = vsyncpa [#allocation6], 1
    %386 = vsyncpa [#allocation9], 1
    %387 = vsyncpa [#allocation4], 1

</llo_original>
